<compile_context>
chip_gen: v7x
topology: tpu7x:2x2x1
jax: 0.10.0
libtpu: 0.0.40
codegen_flags: <defaults>
</compile_context>

<pallas_src>
import numpy as np
import jax
import jax.numpy as jnp
from jax.experimental import pallas as pl
from jax.experimental.pallas import tpu as pltpu

# -3/4 * (3/pi)^(1/3), computed once on the host in double precision.
_LDA_X_COEF = -3.0 / 4.0 * (3.0 / np.pi) ** (1.0 / 3.0)

_COL_CANDIDATES = (4096, 2048, 1024, 512, 256, 128)
_TARGET_TILE_BYTES = 2 << 20  # ~2 MiB per tile


def _lda_x_kernel(rho_ref, out_ref):
    """out = coef * cbrt(rho), elementwise on one (block_rows, cols) tile."""
    rho = rho_ref[...].astype(jnp.float32)
    # cbrt via exp/log (EUP slot); 0 -> 0, negative -> NaN (same as torch.pow).
    cbrt = jnp.exp(jnp.log(rho) * jnp.float32(1.0 / 3.0))
    out_ref[...] = (jnp.float32(_LDA_X_COEF) * cbrt).astype(out_ref.dtype)


def _choose_cols(n):
    """Largest lane-dense width (multiple of 128) that divides n, else None."""
    for c in _COL_CANDIDATES:
        if n % c == 0:
            return c
    return None


def _pick_block_rows(rows, cols, itemsize, target_bytes=_TARGET_TILE_BYTES):
    """Pick a sublane-aligned block row count giving ~target_bytes per tile."""
    # Sublane packing multiple: 8 for 32-bit, 16 for 16-bit, 32 for 8-bit dtypes.
    sub = 8 * max(1, 4 // int(itemsize))
    br = int(target_bytes) // (cols * int(itemsize))
    br = max(sub, (br // sub) * sub)
    return rows if br >= rows else br


def lda_x(rho):
    """UEG exchange energy density: -3/4 * (3/pi)^(1/3) * rho^(1/3).

    Accepts any-shaped `rho`; returns an array with the same shape/dtype.
    """
    orig_shape = rho.shape
    flat = rho.reshape(-1)
    n = flat.shape[0]
    if n == 0:
        return rho
    itemsize = jnp.dtype(rho.dtype).itemsize

    cols = _choose_cols(n)
    padded_to = n
    if cols is None:
        # rho.size not a multiple of 128: pad minimally. This is the only path
        # that copies the input; lane-aligned sizes are reshaped for free.
        cols = 128 if n < 1024 else 1024
        padded_to = pl.cdiv(n, cols) * cols
        flat = jnp.pad(flat, (0, padded_to - n))

    rows = padded_to // cols
    x2d = flat.reshape(rows, cols)

    block_rows = _pick_block_rows(rows, cols, itemsize)
    grid = (pl.cdiv(rows, block_rows),)

    out2d = pl.pallas_call(
        _lda_x_kernel,
        out_shape=jax.ShapeDtypeStruct((rows, cols), rho.dtype),
        grid=grid,
        in_specs=[pl.BlockSpec((block_rows, cols), lambda i: (i, 0))],
        out_specs=pl.BlockSpec((block_rows, cols), lambda i: (i, 0)),
        compiler_params=pltpu.CompilerParams(
            dimension_semantics=("parallel",),
        ),
    )(x2d)

    out_flat = out2d.reshape(-1)
    if padded_to != n:
        out_flat = out_flat[:n]
    return out_flat.reshape(orig_shape)


if __name__ == "__main__":
    key = jax.random.PRNGKey(0)
    k1, k2 = jax.random.split(key)

    def ref_fn(r):
        return -3.0 / 4.0 * (3.0 / np.pi) ** (1.0 / 3.0) * r ** (1.0 / 3.0)

    # Primary small example: a batch of densities on a grid (lane-aligned path,
    # zero-copy wrapper, single (1, 1024) block).
    rho = jax.random.uniform(k1, (2, 512), dtype=jnp.float32,
                             minval=1e-6, maxval=5.0)
    out = jax.block_until_ready(lda_x(rho))
    np.testing.assert_allclose(np.asarray(out), np.asarray(ref_fn(rho)),
                               rtol=2e-5, atol=1e-6)

    # Misaligned shape: exercises the (rare) minimal-pad fallback path.
    rho2 = jax.random.uniform(k2, (3, 7, 11), dtype=jnp.float32,
                              minval=1e-6, maxval=3.0)
    out2 = jax.block_until_ready(lda_x(rho2))
    np.testing.assert_allclose(np.asarray(out2), np.asarray(ref_fn(rho2)),
                               rtol=2e-5, atol=1e-6)

    print("KERNEL_OK")
</pallas_src>

<mosaic_0001>
module attributes {stable_mosaic.version = 11 : i64} {
  func.func @_lda_x_kernel(%arg0: i32, %arg1: memref<1x1024xf32, #tpu.memory_space<vmem>>, %arg2: memref<1x1024xf32, #tpu.memory_space<vmem>>) attributes {dimension_semantics = [#tpu.dimension_semantics<parallel>], iteration_bounds = array<i64: 1>, scalar_prefetch = 0 : i64, scratch_operands = 0 : i64, tpu.core_type = #tpu.core_type<tc>, window_params = [{transform_indices = @transform_0, window_bounds = array<i64: 1, 1024>}, {transform_indices = @transform_1, window_bounds = array<i64: 1, 1024>}]} {
    %c0 = arith.constant 0 : index
    %c0_0 = arith.constant 0 : index
    %0 = vector.load %arg1[%c0, %c0_0] : memref<1x1024xf32, #tpu.memory_space<vmem>>, vector<1x1024xf32>
    %1 = math.log %0 : vector<1x1024xf32>
    %cst = arith.constant 0.333333343 : f32
    %2 = vector.broadcast %cst : f32 to vector<1x1024xf32>
    %3 = arith.mulf %1, %2 : vector<1x1024xf32>
    %4 = math.exp %3 : vector<1x1024xf32>
    %cst_1 = arith.constant -0.738558769 : f32
    %5 = vector.broadcast %cst_1 : f32 to vector<1x1024xf32>
    %6 = arith.mulf %5, %4 : vector<1x1024xf32>
    %c0_2 = arith.constant 0 : index
    %c0_3 = arith.constant 0 : index
    %7 = vector.load %arg2[%c0_2, %c0_3] : memref<1x1024xf32, #tpu.memory_space<vmem>>, vector<1x1024xf32>
    tpu.vector_store %arg2[%c0_2, %c0_3], %6 {strides = array<i32>} : memref<1x1024xf32, #tpu.memory_space<vmem>>, vector<1x1024xf32>,
    return
  }
  func.func @transform_0(%arg0: i32) -> (i32, i32) {
    %c0_i32 = arith.constant 0 : i32
    %c0_i32_0 = arith.constant 0 : i32
    return %arg0, %c0_i32 : i32, i32
  }
  func.func @transform_1(%arg0: i32) -> (i32, i32) {
    %c0_i32 = arith.constant 0 : i32
    %c0_i32_0 = arith.constant 0 : i32
    return %arg0, %c0_i32 : i32, i32
  }
}

</mosaic_0001>

<llo_original>
// kernel: tpu_custom_call.1
$region0: #{tpu_custom_call.1}
  #allocation0 [shape = 'u32[]', space=smem, size = 0x4, offset = 0x4, fixed_abs, tag = 'smem constant byte address 0x4 - core index']
  #allocation1 [shape = 'u32[144,128]{1,0:T(1,128)}', space=vmem, size = 0x12000, scoped, tag = 'internal scratch']
  %s0 = inlined_call_operand.hbm [shape: f32[1,1024], index: 0, kind: input, shape index: {}]
  %s1 = inlined_call_operand.hbm [shape: f32[1,1024], index: 1, kind: output, shape index: {}]
  %s2 = sld [smem:[#allocation0]]
  $region18: #{tpu_custom_call.1} parent=0
    _
  %s4 = ssub.s32 1, %s2
  %s5 = scalar_select 0, %s4, %s2
  $region1: #{tpu_custom_call.1} parent=0
    #allocation2 [shape = 'u8[4096]{0}', space=vmem, size = 0x1000, scoped, tag = 'input window, operand 0, single buffered']
    #allocation3 [shape = 's32[1]{0}', space=sflag, size = 0x4, scoped, tag = 'scoped memory for tpu_custom_call.1']
    #allocation4 [shape = 's32[1]{0}', space=sflag, size = 0x4, scoped, tag = 'scoped memory for tpu_custom_call.1']
    #allocation5 [shape = 'u8[4096]{0}', space=vmem, size = 0x1000, scoped, tag = 'output window, operand 0, single buffered']
    %6 = vsyncpa [#allocation3], 0
    %7 = vsyncpa [#allocation4], 0
    // Predicated region
    $region2: #{tpu_custom_call.1} parent=1 // pred_check
      _
    $region3: #{tpu_custom_call.1} parent=1 // pred_check_branch
      %9 = sbr.rel (0) target = $region5
    $region4: #{tpu_custom_call.1} parent=1 // pred_region
      %s11 = ssub.s32 128, 128
      %12 = vsyncadd [#allocation3], %s11
      %s14 = sshll.u32 [#allocation2], 4
      %s15 = int_to_ptr.vmem [resolvable:$true] %s14
      %17 = dma.hbm_to_vmem [thread:$0]  %s0, 128, %s15, [#allocation3]
    $region5: #{tpu_custom_call.1} parent=1 // pred_fallthru
      _
    // Predicated region
    $region6: #{tpu_custom_call.1} parent=1 // pred_check
      _
    $region7: #{tpu_custom_call.1} parent=1 // pred_check_branch
      %19 = sbr.rel (0) target = $region9
    $region8: #{tpu_custom_call.1} parent=1 // pred_region
      %20 = dma.done [#allocation3], 128
    $region9: #{tpu_custom_call.1} parent=1 // pred_fallthru
      _
    %v21 = vld [vmem:[#allocation2] sm:$0xff]
    %v22 = vlog2.pop %v21
    %v23 = vmul.f32 %v22, 0.6931472
    %v24 = vmul.f32 %v23, 0.33333334
    %v25 = vmul.f32 %v24, 1.442695
    %v26 = vpow.pop %v25
    %v27 = vmul.f32 %v26, -0.73855877
    %28 = vst [vmem:[#allocation5] sm:$0xff] %v27
    // Predicated region
    $region10: #{tpu_custom_call.1} parent=1 // pred_check
      _
    $region11: #{tpu_custom_call.1} parent=1 // pred_check_branch
      %30 = sbr.rel (0) target = $region13
    $region12: #{tpu_custom_call.1} parent=1 // pred_region
      %s32 = ssub.s32 128, 128
      %33 = vsyncadd [#allocation4], %s32
      %s35 = sshll.u32 [#allocation5], 4
      %s36 = int_to_ptr.vmem [resolvable:$true] %s35
      %38 = dma.vmem_to_hbm [thread:$0]  %s36, 128, %s1, [#allocation4]
    $region13: #{tpu_custom_call.1} parent=1 // pred_fallthru
      _
    // Predicated region
    $region14: #{tpu_custom_call.1} parent=1 // pred_check
      _
    $region15: #{tpu_custom_call.1} parent=1 // pred_check_branch
      %40 = sbr.rel (0) target = $region17
    $region16: #{tpu_custom_call.1} parent=1 // pred_region
      %41 = dma.done [#allocation4], 128
    $region17: #{tpu_custom_call.1} parent=1 // pred_fallthru
      _
    %42 = vsyncpa [#allocation3], 1
    %43 = vsyncpa [#allocation4], 1

</llo_original>
